<compile_context>
chip_gen: v5e
topology: v5e:2x2
jax: 0.10.0
libtpu: 0.0.40
codegen_flags: <defaults>
</compile_context>

<pallas_src>
import numpy as np
import jax
import jax.numpy as jnp
from jax.experimental import pallas as pl
from jax.experimental.pallas import tpu as pltpu


def _round_up(x, m):
    return (x + m - 1) // m * m


def st_layer_kernel(fact_rel_ref, w_t_ref, fact_query_ref, prior_ref, f2t_ref,
                    out_ref, acc_ref):
    """One (bm-tile, fact-tile) grid step of the fused fact-propagation."""
    k = pl.program_id(1)

    @pl.when(k == 0)
    def _init():
        acc_ref[...] = jnp.zeros_like(acc_ref)

    # Linear(fact_rel): bias is folded in via the ones column of fact_rel and
    # the matching row of w_t.  bf16 inputs, f32 accumulation on the MXU.
    lin = jnp.dot(fact_rel_ref[...], w_t_ref[...],
                  preferred_element_type=jnp.float32)           # (TF, Hpad) f32

    # relu(linear * query) * prior  -- elementwise kept in f32 (v5e-safe).
    fact_val = jnp.maximum(lin * fact_query_ref[...], 0.0) * prior_ref[...]

    # Accumulate fact2tail_tile @ fact_val into the f32 VMEM scratch.
    acc_ref[...] += jnp.dot(f2t_ref[...], fact_val.astype(jnp.bfloat16),
                            preferred_element_type=jnp.float32)

    @pl.when(k == pl.num_programs(1) - 1)
    def _store():
        out_ref[...] = acc_ref[...].astype(out_ref.dtype)


def st_layer_forward(input_vector, edge_list, curr_dist, instruction,
                     rel_features, weight, bias, *, tbm_max=256, tf_max=512):
    """Pallas implementation of the KB fact-propagation forward.

    input_vector: (B, M, H) -- only its shape is used (as in the torch code)
    edge_list: (batch_heads, batch_rels, batch_tails, batch_ids, fact_ids, weights)
    curr_dist: (B, M)         instruction: (B, H)
    rel_features: (num_relations, in_features)
    weight: (H, in_features)  bias: (H,)
    """
    batch_heads, batch_rels, batch_tails, batch_ids, fact_ids, _ = edge_list
    B, M, H = input_vector.shape
    num_fact = len(fact_ids)
    BM = B * M
    in_features = rel_features.shape[1]

    f32, bf16 = jnp.float32, jnp.bfloat16
    heads = jnp.asarray(batch_heads, jnp.int32)
    rels = jnp.asarray(batch_rels, jnp.int32)
    tails = jnp.asarray(batch_tails, jnp.int32)
    bids = jnp.asarray(batch_ids, jnp.int32)
    fids = jnp.asarray(fact_ids, jnp.int32)

    # ---- padded geometry ---------------------------------------------------
    Hpad = _round_up(H, 128)                   # lane-dense output / MXU N
    Kpad = _round_up(in_features + 1, 128)     # +1 column carries the bias
    TBM = tbm_max if BM >= tbm_max else _round_up(BM, 8)
    TF = tf_max if num_fact >= tf_max else _round_up(num_fact, 128)
    BMpad = _round_up(BM, TBM)
    Fpad = _round_up(num_fact, TF)
    n_bm, n_f = BMpad // TBM, Fpad // TF

    # ---- glue (gathers / scatters / padding, fused by XLA) ------------------
    # fact_rel = rel_features[batch_rels], with a ones column for the bias fold.
    fact_rel = jnp.take(rel_features.astype(f32), rels, axis=0)
    fact_rel_p = jnp.zeros((Fpad, Kpad), f32)
    fact_rel_p = fact_rel_p.at[:num_fact, :in_features].set(fact_rel)
    fact_rel_p = fact_rel_p.at[:, in_features].set(1.0)

    # W^T with the bias folded into the extra K row.
    w_t_p = jnp.zeros((Kpad, Hpad), f32)
    w_t_p = w_t_p.at[:in_features, :H].set(weight.T.astype(f32))
    w_t_p = w_t_p.at[in_features, :H].set(bias.astype(f32))

    # fact_query = instruction[batch_ids]
    fact_query = jnp.take(instruction.astype(f32), bids, axis=0)
    fact_query_p = jnp.zeros((Fpad, Hpad), f32).at[:num_fact, :H].set(fact_query)

    # fact_prior = head2fact_mat @ curr_dist.view(-1, 1) done as a gather +
    # segment-sum (duplicate (fact, head) pairs still accumulate).
    curr_flat = curr_dist.reshape(BM).astype(f32)
    prior = jnp.zeros((num_fact,), f32).at[fids].add(curr_flat[heads])
    prior_p = jnp.zeros((Fpad, 1), f32).at[:num_fact, 0].set(prior)

    # fact2tail dense 0/1 count matrix (exact in bf16).
    # TODO(synk): for real GraftNet fact counts, replace this dense BMxF matmul
    # with a tail-sorted segment scatter (scalar-prefetched segment offsets).
    f2t = jnp.zeros((BMpad, Fpad), f32).at[tails, fids].add(1.0)

    grid_spec = pltpu.PrefetchScalarGridSpec(
        num_scalar_prefetch=0,
        grid=(n_bm, n_f),                                  # reduction axis last
        in_specs=[
            pl.BlockSpec((TF, Kpad), lambda i, k: (k, 0)),     # fact_rel
            pl.BlockSpec((Kpad, Hpad), lambda i, k: (0, 0)),   # w_t (resident)
            pl.BlockSpec((TF, Hpad), lambda i, k: (k, 0)),     # fact_query
            pl.BlockSpec((TF, 1), lambda i, k: (k, 0)),        # fact_prior
            pl.BlockSpec((TBM, TF), lambda i, k: (i, k)),      # f2t
        ],
        out_specs=pl.BlockSpec((TBM, Hpad), lambda i, k: (i, 0)),
        scratch_shapes=[pltpu.VMEM((TBM, Hpad), jnp.float32)],
    )

    out = pl.pallas_call(
        st_layer_kernel,
        out_shape=jax.ShapeDtypeStruct((BMpad, Hpad), jnp.float32),
        grid_spec=grid_spec,
        compiler_params=pltpu.CompilerParams(
            dimension_semantics=("parallel", "arbitrary"),
            vmem_limit_bytes=32 * 1024 * 1024),
    )(fact_rel_p.astype(bf16), w_t_p.astype(bf16), fact_query_p,
      prior_p, f2t.astype(bf16))

    return out[:BM, :H].reshape(B, M, H)


# ----------------------------- references -----------------------------------
def _reference_f32(input_vector, edge_list, curr_dist, instruction,
                   rel_features, weight, bias):
    """Pure-JAX f32 reference with the original torch.sparse semantics."""
    batch_heads, batch_rels, batch_tails, batch_ids, fact_ids, _ = edge_list
    B, M, H = input_vector.shape
    num_fact = len(fact_ids)
    BM = B * M
    fact_rel = rel_features[jnp.asarray(batch_rels)]
    fact_query = instruction[jnp.asarray(batch_ids)]
    fact_val = jax.nn.relu((fact_rel @ weight.T + bias) * fact_query)
    h2f = jnp.zeros((num_fact, BM)).at[jnp.asarray(fact_ids),
                                       jnp.asarray(batch_heads)].add(1.0)
    f2t = jnp.zeros((BM, num_fact)).at[jnp.asarray(batch_tails),
                                       jnp.asarray(fact_ids)].add(1.0)
    fact_prior = h2f @ curr_dist.reshape(-1, 1)
    return (f2t @ (fact_val * fact_prior)).reshape(B, M, H)


def _reference_bf16(input_vector, edge_list, curr_dist, instruction,
                    rel_features, weight, bias):
    """Reference using the same bf16-in / f32-accumulate recipe as the kernel."""
    batch_heads, batch_rels, batch_tails, batch_ids, fact_ids, _ = edge_list
    B, M, H = input_vector.shape
    num_fact = len(fact_ids)
    BM = B * M
    f32, bf16 = jnp.float32, jnp.bfloat16
    heads = jnp.asarray(batch_heads, jnp.int32)
    rels = jnp.asarray(batch_rels, jnp.int32)
    tails = jnp.asarray(batch_tails, jnp.int32)
    bids = jnp.asarray(batch_ids, jnp.int32)
    fids = jnp.asarray(fact_ids, jnp.int32)
    fact_rel = jnp.take(rel_features, rels, axis=0).astype(bf16)
    fact_query = jnp.take(instruction, bids, axis=0).astype(f32)
    lin = jnp.dot(fact_rel, weight.T.astype(bf16),
                  preferred_element_type=f32) + bias.astype(bf16).astype(f32)
    prior = jnp.zeros((num_fact,), f32).at[fids].add(
        curr_dist.reshape(-1).astype(f32)[heads])
    fact_val = jnp.maximum(lin * fact_query, 0.0) * prior[:, None]
    f2t = jnp.zeros((BM, num_fact), f32).at[tails, fids].add(1.0).astype(bf16)
    out = jnp.dot(f2t, fact_val.astype(bf16), preferred_element_type=f32)
    return out.reshape(B, M, H)


if __name__ == "__main__":
    key = jax.random.PRNGKey(0)
    B, M, H = 2, 8, 32            # batch, max_local_entity, hidden_size
    in_features = out_features = H
    num_relations = 8
    num_fact = 16

    ks = jax.random.split(key, 8)
    input_vector = jax.random.normal(ks[0], (B, M, H), jnp.float32)
    curr_dist = jax.nn.softmax(jax.random.normal(ks[1], (B, M), jnp.float32), axis=-1)
    instruction = jax.random.normal(ks[2], (B, H), jnp.float32)
    rel_features = jax.random.normal(ks[3], (num_relations, in_features), jnp.float32)

    # Deterministic Linear(in_features, out_features) params.
    weight = jax.random.normal(ks[4], (out_features, in_features), jnp.float32) * 0.1
    bias = jax.random.normal(ks[5], (out_features,), jnp.float32) * 0.1

    # Deterministic edge list (python ints, like the torch code's lists).
    # NOTE: weight_list is ignored (unit weights), matching the previous kernel.
    rng = np.random.RandomState(0)
    batch_ids = rng.randint(0, B, size=num_fact)
    batch_heads = (batch_ids * M + rng.randint(0, M, size=num_fact)).tolist()
    batch_tails = (batch_ids * M + rng.randint(0, M, size=num_fact)).tolist()
    batch_rels = rng.randint(0, num_relations, size=num_fact).tolist()
    fact_ids = list(range(num_fact))
    weight_list = [1.0] * num_fact
    batch_ids = batch_ids.tolist()
    edge_list = (batch_heads, batch_rels, batch_tails, batch_ids, fact_ids, weight_list)

    out = st_layer_forward(input_vector, edge_list, curr_dist, instruction,
                           rel_features, weight, bias)
    out = jax.block_until_ready(out)

    assert out.shape == (B, M, H)
    assert not bool(jnp.isnan(out).any())

    # Logic check against a precision-matched (bf16-in / f32-acc) reference.
    ref_bf16 = _reference_bf16(input_vector, edge_list, curr_dist, instruction,
                               rel_features, weight, bias)
    np.testing.assert_allclose(np.asarray(out), np.asarray(ref_bf16),
                               rtol=1e-2, atol=1e-4)

    # Fidelity check against the full-f32 torch-semantics reference
    # (tolerance relaxed for the bf16 matmul operands, f32 accumulator).
    ref_f32 = _reference_f32(input_vector, edge_list, curr_dist, instruction,
                             rel_features, weight, bias)
    np.testing.assert_allclose(np.asarray(out), np.asarray(ref_f32),
                               rtol=5e-2, atol=1.5e-2)

    print("KERNEL_OK")
</pallas_src>

<mosaic_0001>
module attributes {stable_mosaic.version = 11 : i64} {
  func.func @st_layer_kernel(%arg0: i32, %arg1: i32, %arg2: memref<128x128xbf16, #tpu.memory_space<vmem>>, %arg3: memref<128x128xbf16, #tpu.memory_space<vmem>>, %arg4: memref<128x128xf32, #tpu.memory_space<vmem>>, %arg5: memref<128x1xf32, #tpu.memory_space<vmem>>, %arg6: memref<16x128xbf16, #tpu.memory_space<vmem>>, %arg7: memref<16x128xf32, #tpu.memory_space<vmem>>, %arg8: memref<16x128xf32, #tpu.memory_space<vmem>>) attributes {dimension_semantics = [#tpu.dimension_semantics<parallel>, #tpu.dimension_semantics<arbitrary>], iteration_bounds = array<i64: 1, 1>, scalar_prefetch = 0 : i64, scratch_operands = 1 : i64, tpu.core_type = #tpu.core_type<tc>, window_params = [{transform_indices = @transform_0, window_bounds = array<i64: 128, 128>}, {pipeline_mode = #tpu.pipeline_mode<synchronous>, transform_indices = @transform_1, window_bounds = array<i64: 128, 128>}, {transform_indices = @transform_2, window_bounds = array<i64: 128, 128>}, {transform_indices = @transform_3, window_bounds = array<i64: 128, 1>}, {transform_indices = @transform_4, window_bounds = array<i64: 16, 128>}, {transform_indices = @transform_5, window_bounds = array<i64: 16, 128>}]} {
    %c0_i32 = arith.constant 0 : i32
    %0 = arith.cmpi eq, %arg1, %c0_i32 : i32
    %1 = arith.extui %0 : i1 to i32
    %c0_i32_0 = arith.constant 0 : i32
    %2 = arith.cmpi ne, %1, %c0_i32_0 : i32
    scf.if %2 {
      %cst_18 = arith.constant 0.000000e+00 : f32
      %22 = vector.broadcast %cst_18 : f32 to vector<16x128xf32>
      %c0_19 = arith.constant 0 : index
      %c0_20 = arith.constant 0 : index
      %23 = vector.load %arg8[%c0_19, %c0_20] : memref<16x128xf32, #tpu.memory_space<vmem>>, vector<16x128xf32>
      tpu.vector_store %arg8[%c0_19, %c0_20], %22 {strides = array<i32>} : memref<16x128xf32, #tpu.memory_space<vmem>>, vector<16x128xf32>,
    } else {
    }
    %c0 = arith.constant 0 : index
    %c0_1 = arith.constant 0 : index
    %3 = vector.load %arg2[%c0, %c0_1] : memref<128x128xbf16, #tpu.memory_space<vmem>>, vector<128x128xbf16>
    %c0_2 = arith.constant 0 : index
    %c0_3 = arith.constant 0 : index
    %4 = vector.load %arg3[%c0_2, %c0_3] : memref<128x128xbf16, #tpu.memory_space<vmem>>, vector<128x128xbf16>
    %cst = arith.constant dense<0.000000e+00> : vector<128x128xf32>
    %5 = tpu.matmul %3, %4, %cst {dimension_numbers = #tpu.dot_dimension_numbers<[1], [0], [0], [1], [0, 0, 1, 1], [], []>} : vector<128x128xbf16>, vector<128x128xbf16>, vector<128x128xf32> -> vector<128x128xf32>
    %c0_4 = arith.constant 0 : index
    %c0_5 = arith.constant 0 : index
    %6 = vector.load %arg4[%c0_4, %c0_5] : memref<128x128xf32, #tpu.memory_space<vmem>>, vector<128x128xf32>
    %7 = arith.mulf %5, %6 : vector<128x128xf32>
    %cst_6 = arith.constant 0.000000e+00 : f32
    %8 = vector.broadcast %cst_6 : f32 to vector<128x128xf32>
    %9 = arith.maximumf %7, %8 : vector<128x128xf32>
    %c0_7 = arith.constant 0 : index
    %c0_8 = arith.constant 0 : index
    %10 = vector.load %arg5[%c0_7, %c0_8] : memref<128x1xf32, #tpu.memory_space<vmem>>, vector<128x1xf32>
    %11 = vector.broadcast %10 : vector<128x1xf32> to vector<128x128xf32>
    %12 = arith.mulf %9, %11 : vector<128x128xf32>
    %c0_9 = arith.constant 0 : index
    %c0_10 = arith.constant 0 : index
    %13 = vector.load %arg8[%c0_9, %c0_10] : memref<16x128xf32, #tpu.memory_space<vmem>>, vector<16x128xf32>
    %c0_11 = arith.constant 0 : index
    %c0_12 = arith.constant 0 : index
    %14 = vector.load %arg6[%c0_11, %c0_12] : memref<16x128xbf16, #tpu.memory_space<vmem>>, vector<16x128xbf16>
    %15 = arith.truncf %12 : vector<128x128xf32> to vector<128x128xbf16>
    %cst_13 = arith.constant dense<0.000000e+00> : vector<16x128xf32>
    %16 = tpu.matmul %14, %15, %cst_13 {dimension_numbers = #tpu.dot_dimension_numbers<[1], [0], [0], [1], [0, 0, 1, 1], [], []>} : vector<16x128xbf16>, vector<128x128xbf16>, vector<16x128xf32> -> vector<16x128xf32>
    %17 = arith.addf %13, %16 : vector<16x128xf32>
    %c0_14 = arith.constant 0 : index
    %c0_15 = arith.constant 0 : index
    %18 = vector.load %arg8[%c0_14, %c0_15] : memref<16x128xf32, #tpu.memory_space<vmem>>, vector<16x128xf32>
    tpu.vector_store %arg8[%c0_14, %c0_15], %17 {strides = array<i32>} : memref<16x128xf32, #tpu.memory_space<vmem>>, vector<16x128xf32>,
    %c0_i32_16 = arith.constant 0 : i32
    %19 = arith.cmpi eq, %arg1, %c0_i32_16 : i32
    %20 = arith.extui %19 : i1 to i32
    %c0_i32_17 = arith.constant 0 : i32
    %21 = arith.cmpi ne, %20, %c0_i32_17 : i32
    scf.if %21 {
      %c0_18 = arith.constant 0 : index
      %c0_19 = arith.constant 0 : index
      %22 = vector.load %arg8[%c0_18, %c0_19] : memref<16x128xf32, #tpu.memory_space<vmem>>, vector<16x128xf32>
      %c0_20 = arith.constant 0 : index
      %c0_21 = arith.constant 0 : index
      %23 = vector.load %arg7[%c0_20, %c0_21] : memref<16x128xf32, #tpu.memory_space<vmem>>, vector<16x128xf32>
      tpu.vector_store %arg7[%c0_20, %c0_21], %22 {strides = array<i32>} : memref<16x128xf32, #tpu.memory_space<vmem>>, vector<16x128xf32>,
    } else {
    }
    return
  }
  func.func @transform_0(%arg0: i32, %arg1: i32) -> (i32, i32) {
    %c0_i32 = arith.constant 0 : i32
    %c0_i32_0 = arith.constant 0 : i32
    return %arg1, %c0_i32 : i32, i32
  }
  func.func @transform_1(%arg0: i32, %arg1: i32) -> (i32, i32) {
    %c0_i32 = arith.constant 0 : i32
    %c0_i32_0 = arith.constant 0 : i32
    %c0_i32_1 = arith.constant 0 : i32
    return %c0_i32, %c0_i32_0 : i32, i32
  }
  func.func @transform_2(%arg0: i32, %arg1: i32) -> (i32, i32) {
    %c0_i32 = arith.constant 0 : i32
    %c0_i32_0 = arith.constant 0 : i32
    return %arg1, %c0_i32 : i32, i32
  }
  func.func @transform_3(%arg0: i32, %arg1: i32) -> (i32, i32) {
    %c0_i32 = arith.constant 0 : i32
    %c0_i32_0 = arith.constant 0 : i32
    return %arg1, %c0_i32 : i32, i32
  }
  func.func @transform_4(%arg0: i32, %arg1: i32) -> (i32, i32) {
    %c0_i32 = arith.constant 0 : i32
    return %arg0, %arg1 : i32, i32
  }
  func.func @transform_5(%arg0: i32, %arg1: i32) -> (i32, i32) {
    %c0_i32 = arith.constant 0 : i32
    %c0_i32_0 = arith.constant 0 : i32
    return %arg0, %c0_i32 : i32, i32
  }
}

</mosaic_0001>

<llo_original>
// kernel: tpu_custom_call.1
$region0: #{tpu_custom_call.1}
  #allocation0 [shape = 'u32[]', space=smem, size = 0x4, offset = 0x4, fixed_abs, tag = 'smem constant byte address 0x4 - core index']
  #allocation1 [shape = 'u32[72,128]{1,0:T(1,128)}', space=vmem, size = 0x9000, scoped, tag = 'internal scratch']
  #allocation2 [shape = 'f32[16,128]{1,0:T(8,128)}', space=vmem, size = 0x2000, scoped, tag = 'scratch operand']
  %s0 = inlined_call_operand.hbm [shape: bf16[128,128], index: 0, kind: input, shape index: {}]
  %s1 = inlined_call_operand.hbm [shape: bf16[128,128], index: 1, kind: input, shape index: {}]
  %s2 = inlined_call_operand.vmem [shape: f32[128,128], index: 2, kind: input, shape index: {}]
  %s3 = inlined_call_operand.vmem [shape: f32[128,1], index: 3, kind: input, shape index: {}]
  %s4 = inlined_call_operand.hbm [shape: bf16[16,128], index: 4, kind: input, shape index: {}]
  %s5 = inlined_call_operand.hbm [shape: f32[16,128], index: 5, kind: output, shape index: {}]
  %s6 = sld [smem:[#allocation0]]
  $region50: #{tpu_custom_call.1} parent=0
    _
  %s8 = ssub.s32 1, %s6
  %s9 = scalar_select 0, %s8, %s6
  $region1: #{tpu_custom_call.1} parent=0
    #allocation3 [shape = 'u8[32768]{0}', space=vmem, size = 0x8000, scoped, tag = 'input window, operand 0, single buffered']
    #allocation4 [shape = 's32[1]{0}', space=sflag, size = 0x4, scoped, tag = 'scoped memory for tpu_custom_call.1']
    #allocation5 [shape = 's32[1]{0}', space=sflag, size = 0x4, scoped, tag = 'scoped memory for tpu_custom_call.1']
    #allocation6 [shape = 'u8[32768]{0}', space=vmem, size = 0x8000, scoped, tag = 'input window, operand 1, single buffered']
    #allocation7 [shape = 's32[1]{0}', space=sflag, size = 0x4, scoped, tag = 'scoped memory for tpu_custom_call.1']
    #allocation8 [shape = 'u8[4096]{0}', space=vmem, size = 0x1000, scoped, tag = 'input window, operand 4, single buffered']
    #allocation9 [shape = 'u8[8192]{0}', space=vmem, size = 0x2000, scoped, tag = 'output window, operand 0, single buffered']
    %10 = vsyncpa [#allocation4], 0
    %11 = vsyncpa [#allocation7], 0
    %12 = vsyncpa [#allocation5], 0
    // Predicated region
    $region2: #{tpu_custom_call.1} parent=1 // pred_check
      _
    $region3: #{tpu_custom_call.1} parent=1 // pred_check_branch
      %14 = sbr.rel (0) target = $region5
    $region4: #{tpu_custom_call.1} parent=1 // pred_region
      %16 = vsyncadd [#allocation4], 0
      %s17 = sshll.u32 %s0, 4
      %s18 = int_to_ptr.hbm [resolvable:$true] %s17
      %s19 = sshll.u32 [#allocation3], 4
      %s20 = int_to_ptr.vmem [resolvable:$true] %s19
      %25 = dma.hbm_to_vmem [thread:$0]  %s18, 1024, %s20, [#allocation4], 64, 64, 4
    $region5: #{tpu_custom_call.1} parent=1 // pred_fallthru
      _
    // Predicated region
    $region6: #{tpu_custom_call.1} parent=1 // pred_check
      _
    $region7: #{tpu_custom_call.1} parent=1 // pred_check_branch
      %27 = sbr.rel (0) target = $region9
    $region8: #{tpu_custom_call.1} parent=1 // pred_region
      %29 = vsyncadd [#allocation7], 0
      %s30 = sshll.u32 %s1, 4
      %s31 = int_to_ptr.hbm [resolvable:$true] %s30
      %s32 = sshll.u32 [#allocation6], 4
      %s33 = int_to_ptr.vmem [resolvable:$true] %s32
      %38 = dma.hbm_to_vmem [thread:$0]  %s31, 1024, %s33, [#allocation7], 64, 64, 4
    $region9: #{tpu_custom_call.1} parent=1 // pred_fallthru
      _
    // Predicated region
    $region10: #{tpu_custom_call.1} parent=1 // pred_check
      _
    $region11: #{tpu_custom_call.1} parent=1 // pred_check_branch
      %40 = sbr.rel (0) target = $region13
    $region12: #{tpu_custom_call.1} parent=1 // pred_region
      _
    $region13: #{tpu_custom_call.1} parent=1 // pred_fallthru
      _
    // Predicated region
    $region14: #{tpu_custom_call.1} parent=1 // pred_check
      _
    $region15: #{tpu_custom_call.1} parent=1 // pred_check_branch
      %42 = sbr.rel (0) target = $region17
    $region16: #{tpu_custom_call.1} parent=1 // pred_region
      _
    $region17: #{tpu_custom_call.1} parent=1 // pred_fallthru
      _
    // Predicated region
    $region18: #{tpu_custom_call.1} parent=1 // pred_check
      _
    $region19: #{tpu_custom_call.1} parent=1 // pred_check_branch
      %44 = sbr.rel (0) target = $region21
    $region20: #{tpu_custom_call.1} parent=1 // pred_region
      %46 = vsyncadd [#allocation7], 0
      %s47 = sshll.u32 %s4, 4
      %s48 = int_to_ptr.hbm [resolvable:$true] %s47
      %s49 = sshll.u32 [#allocation8], 4
      %s50 = int_to_ptr.vmem [resolvable:$true] %s49
      %55 = dma.hbm_to_vmem [thread:$0]  %s48, 128, %s50, [#allocation7], 64, 64, 4
    $region21: #{tpu_custom_call.1} parent=1 // pred_fallthru
      _
    // Predicated region
    $region22: #{tpu_custom_call.1} parent=1 // pred_check
      _
    $region23: #{tpu_custom_call.1} parent=1 // pred_check_branch
      %57 = sbr.rel (0) target = $region25
    $region24: #{tpu_custom_call.1} parent=1 // pred_region
      %59 = dma.done [#allocation4], 1024
    $region25: #{tpu_custom_call.1} parent=1 // pred_fallthru
      _
    // Predicated region
    $region26: #{tpu_custom_call.1} parent=1 // pred_check
      _
    $region27: #{tpu_custom_call.1} parent=1 // pred_check_branch
      %61 = sbr.rel (0) target = $region29
    $region28: #{tpu_custom_call.1} parent=1 // pred_region
      %63 = dma.done [#allocation7], 1024
    $region29: #{tpu_custom_call.1} parent=1 // pred_fallthru
      _
    // Predicated region
    $region30: #{tpu_custom_call.1} parent=1 // pred_check
      _
    $region31: #{tpu_custom_call.1} parent=1 // pred_check_branch
      %65 = sbr.rel (0) target = $region33
    $region32: #{tpu_custom_call.1} parent=1 // pred_region
      %67 = dma.done [#allocation7], 128
    $region33: #{tpu_custom_call.1} parent=1 // pred_fallthru
      _
    %p68 = scmp.eq.s32.totalorder 0, 0
    // Predicated region
    $region34: #{tpu_custom_call.1} parent=1 // pred_check
      %p69 = pneg %p68
    $region35: #{tpu_custom_call.1} parent=1 // pred_check_branch
      %71 = sbr.rel (%p69) target = $region37
    $region36: #{tpu_custom_call.1} parent=1 // pred_region
      %72 = vst [vmem:[#allocation2] sm:$0xff] 0.0
      %73 = vst [vmem:[#allocation2 + $0x8] sm:$0xff] 0.0
    $region37: #{tpu_custom_call.1} parent=1 // pred_fallthru
      _
    %v74 = vld [vmem:[#allocation3] sm:$0xf]
    %v75 = vld [vmem:[#allocation3 + $0x4] sm:$0xf]
    %v76 = vld [vmem:[#allocation3 + $0x8] sm:$0xf]
    %v77 = vld [vmem:[#allocation3 + $0xc] sm:$0xf]
    %v78 = vld [vmem:[#allocation3 + $0x10] sm:$0xf]
    %v79 = vld [vmem:[#allocation3 + $0x14] sm:$0xf]
    %v80 = vld [vmem:[#allocation3 + $0x18] sm:$0xf]
    %v81 = vld [vmem:[#allocation3 + $0x1c] sm:$0xf]
    %v82 = vld [vmem:[#allocation3 + $0x20] sm:$0xf]
    %v83 = vld [vmem:[#allocation3 + $0x24] sm:$0xf]
    %v84 = vld [vmem:[#allocation3 + $0x28] sm:$0xf]
    %v85 = vld [vmem:[#allocation3 + $0x2c] sm:$0xf]
    %v86 = vld [vmem:[#allocation3 + $0x30] sm:$0xf]
    %v87 = vld [vmem:[#allocation3 + $0x34] sm:$0xf]
    %v88 = vld [vmem:[#allocation3 + $0x38] sm:$0xf]
    %v89 = vld [vmem:[#allocation3 + $0x3c] sm:$0xf]
    %v90 = vld [vmem:[#allocation6] sm:$0xf]
    %v91 = vld [vmem:[#allocation6 + $0x4] sm:$0xf]
    %v92 = vld [vmem:[#allocation6 + $0x8] sm:$0xf]
    %v93 = vld [vmem:[#allocation6 + $0xc] sm:$0xf]
    %v94 = vld [vmem:[#allocation6 + $0x10] sm:$0xf]
    %v95 = vld [vmem:[#allocation6 + $0x14] sm:$0xf]
    %v96 = vld [vmem:[#allocation6 + $0x18] sm:$0xf]
    %v97 = vld [vmem:[#allocation6 + $0x1c] sm:$0xf]
    %v98 = vld [vmem:[#allocation6 + $0x20] sm:$0xf]
    %v99 = vld [vmem:[#allocation6 + $0x24] sm:$0xf]
    %v100 = vld [vmem:[#allocation6 + $0x28] sm:$0xf]
    %v101 = vld [vmem:[#allocation6 + $0x2c] sm:$0xf]
    %v102 = vld [vmem:[#allocation6 + $0x30] sm:$0xf]
    %v103 = vld [vmem:[#allocation6 + $0x34] sm:$0xf]
    %v104 = vld [vmem:[#allocation6 + $0x38] sm:$0xf]
    %v105 = vld [vmem:[#allocation6 + $0x3c] sm:$0xf]
    %v122 = vunpack.c.l.b16 %v74
    %v123 = vunpack.c.l.b16 %v75
    %v124 = vunpack.c.l.b16 %v76
    %v125 = vunpack.c.l.b16 %v77
    %v126 = vunpack.c.l.b16 %v78
    %v127 = vunpack.c.l.b16 %v79
    %v128 = vunpack.c.l.b16 %v80
    %v129 = vunpack.c.l.b16 %v81
    %v130 = vunpack.c.l.b16 %v82
    %v131 = vunpack.c.l.b16 %v83
    %v132 = vunpack.c.l.b16 %v84
    %v133 = vunpack.c.l.b16 %v85
    %v134 = vunpack.c.l.b16 %v86
    %v135 = vunpack.c.l.b16 %v87
    %v136 = vunpack.c.l.b16 %v88
    %v137 = vunpack.c.l.b16 %v89
    %v138 = vpack.c.b16 %v123, %v122
    %v139 = vpack.c.b16 %v125, %v124
    %v140 = vpack.c.b16 %v127, %v126
    %v141 = vpack.c.b16 %v129, %v128
    %v142 = vpack.c.b16 %v131, %v130
    %v143 = vpack.c.b16 %v133, %v132
    %v144 = vpack.c.b16 %v135, %v134
    %v145 = vpack.c.b16 %v137, %v136
    %v170 = vunpack.c.l.b16 %v90
    %v171 = vunpack.c.l.b16 %v91
    %v172 = vunpack.c.l.b16 %v92
    %v173 = vunpack.c.l.b16 %v93
    %v174 = vunpack.c.l.b16 %v94
    %v175 = vunpack.c.l.b16 %v95
    %v176 = vunpack.c.l.b16 %v96
    %v177 = vunpack.c.l.b16 %v97
    %v178 = vunpack.c.l.b16 %v98
    %v179 = vunpack.c.l.b16 %v99
    %v180 = vunpack.c.l.b16 %v100
    %v181 = vunpack.c.l.b16 %v101
    %v182 = vunpack.c.l.b16 %v102
    %v183 = vunpack.c.l.b16 %v103
    %v184 = vunpack.c.l.b16 %v104
    %v185 = vunpack.c.l.b16 %v105
    %v186 = vpack.c.b16 %v171, %v170
    %v187 = vpack.c.b16 %v173, %v172
    %v188 = vpack.c.b16 %v175, %v174
    %v189 = vpack.c.b16 %v177, %v176
    %v190 = vpack.c.b16 %v179, %v178
    %v191 = vpack.c.b16 %v181, %v180
    %v192 = vpack.c.b16 %v183, %v182
    %v193 = vpack.c.b16 %v185, %v184
    %202 = vmatpush.bf16.msra.mxu0 %v193
    %203 = vmatpush.bf16.msra.mxu0 %v192
    %204 = vmatpush.bf16.msra.mxu0 %v191
    %205 = vmatpush.bf16.msra.mxu0 %v190
    %206 = vmatpush.bf16.msra.mxu0 %v189
    %207 = vmatpush.bf16.msra.mxu0 %v188
    %208 = vmatpush.bf16.msra.mxu0 %v187
    %209 = vmatpush.bf16.msra.mxu0 %v186
    %210 = vmatmul.bf16.gmra.mxu0 %v138
    %v211 = vpop.f32.mrf.mxu0
    %v212 = vadd.f32 0.0, %v211
    %v213 = vpop.f32.mrf.mxu0
    %v214 = vadd.f32 0.0, %v213
    %215 = vmatmul.bf16.gmra.mxu0 %v139
    %v216 = vpop.f32.mrf.mxu0
    %v217 = vadd.f32 0.0, %v216
    %v218 = vpop.f32.mrf.mxu0
    %v219 = vadd.f32 0.0, %v218
    %220 = vmatmul.bf16.gmra.mxu0 %v140
    %v221 = vpop.f32.mrf.mxu0
    %v222 = vadd.f32 0.0, %v221
    %v223 = vpop.f32.mrf.mxu0
    %v224 = vadd.f32 0.0, %v223
    %225 = vmatmul.bf16.gmra.mxu0 %v141
    %v226 = vpop.f32.mrf.mxu0
    %v227 = vadd.f32 0.0, %v226
    %v228 = vpop.f32.mrf.mxu0
    %v229 = vadd.f32 0.0, %v228
    %230 = vmatmul.bf16.gmra.mxu0 %v142
    %v231 = vpop.f32.mrf.mxu0
    %v232 = vadd.f32 0.0, %v231
    %v233 = vpop.f32.mrf.mxu0
    %v234 = vadd.f32 0.0, %v233
    %235 = vmatmul.bf16.gmra.mxu0 %v143
    %v236 = vpop.f32.mrf.mxu0
    %v237 = vadd.f32 0.0, %v236
    %v238 = vpop.f32.mrf.mxu0
    %v239 = vadd.f32 0.0, %v238
    %240 = vmatmul.bf16.gmra.mxu0 %v144
    %v241 = vpop.f32.mrf.mxu0
    %v242 = vadd.f32 0.0, %v241
    %v243 = vpop.f32.mrf.mxu0
    %v244 = vadd.f32 0.0, %v243
    %245 = vmatmul.bf16.gmra.mxu0 %v145
    %v246 = vpop.f32.mrf.mxu0
    %v247 = vadd.f32 0.0, %v246
    %v248 = vpop.f32.mrf.mxu0
    %v249 = vadd.f32 0.0, %v248
    %250 = vdwg.mxu0
    %v251 = vld [vmem:[%s2] sm:$0xff]
    %v252 = vld [vmem:[%s2 + $0x8] sm:$0xff]
    %v253 = vld [vmem:[%s2 + $0x10] sm:$0xff]
    %v254 = vld [vmem:[%s2 + $0x18] sm:$0xff]
    %v255 = vld [vmem:[%s2 + $0x20] sm:$0xff]
    %v256 = vld [vmem:[%s2 + $0x28] sm:$0xff]
    %v257 = vld [vmem:[%s2 + $0x30] sm:$0xff]
    %v258 = vld [vmem:[%s2 + $0x38] sm:$0xff]
    %v259 = vld [vmem:[%s2 + $0x40] sm:$0xff]
    %v260 = vld [vmem:[%s2 + $0x48] sm:$0xff]
    %v261 = vld [vmem:[%s2 + $0x50] sm:$0xff]
    %v262 = vld [vmem:[%s2 + $0x58] sm:$0xff]
    %v263 = vld [vmem:[%s2 + $0x60] sm:$0xff]
    %v264 = vld [vmem:[%s2 + $0x68] sm:$0xff]
    %v265 = vld [vmem:[%s2 + $0x70] sm:$0xff]
    %v266 = vld [vmem:[%s2 + $0x78] sm:$0xff]
    %v267 = vmul.f32 %v212, %v251
    %v268 = vmul.f32 %v214, %v252
    %v269 = vmul.f32 %v217, %v253
    %v270 = vmul.f32 %v219, %v254
    %v271 = vmul.f32 %v222, %v255
    %v272 = vmul.f32 %v224, %v256
    %v273 = vmul.f32 %v227, %v257
    %v274 = vmul.f32 %v229, %v258
    %v275 = vmul.f32 %v232, %v259
    %v276 = vmul.f32 %v234, %v260
    %v277 = vmul.f32 %v237, %v261
    %v278 = vmul.f32 %v239, %v262
    %v279 = vmul.f32 %v242, %v263
    %v280 = vmul.f32 %v244, %v264
    %v281 = vmul.f32 %v247, %v265
    %v282 = vmul.f32 %v249, %v266
    %v283 = vmax.f32 %v267, 0.0
    %v284 = vmax.f32 %v268, 0.0
    %v285 = vmax.f32 %v269, 0.0
    %v286 = vmax.f32 %v270, 0.0
    %v287 = vmax.f32 %v271, 0.0
    %v288 = vmax.f32 %v272, 0.0
    %v289 = vmax.f32 %v273, 0.0
    %v290 = vmax.f32 %v274, 0.0
    %v291 = vmax.f32 %v275, 0.0
    %v292 = vmax.f32 %v276, 0.0
    %v293 = vmax.f32 %v277, 0.0
    %v294 = vmax.f32 %v278, 0.0
    %v295 = vmax.f32 %v279, 0.0
    %v296 = vmax.f32 %v280, 0.0
    %v297 = vmax.f32 %v281, 0.0
    %v298 = vmax.f32 %v282, 0.0
    %v299 = vld [vmem:[%s3] sm:$0xff]
    %v300 = vld [vmem:[%s3 + $0x8] sm:$0xff]
    %v301 = vld [vmem:[%s3 + $0x10] sm:$0xff]
    %v302 = vld [vmem:[%s3 + $0x18] sm:$0xff]
    %v303 = vld [vmem:[%s3 + $0x20] sm:$0xff]
    %v304 = vld [vmem:[%s3 + $0x28] sm:$0xff]
    %v305 = vld [vmem:[%s3 + $0x30] sm:$0xff]
    %v306 = vld [vmem:[%s3 + $0x38] sm:$0xff]
    %v307 = vld [vmem:[%s3 + $0x40] sm:$0xff]
    %v308 = vld [vmem:[%s3 + $0x48] sm:$0xff]
    %v309 = vld [vmem:[%s3 + $0x50] sm:$0xff]
    %v310 = vld [vmem:[%s3 + $0x58] sm:$0xff]
    %v311 = vld [vmem:[%s3 + $0x60] sm:$0xff]
    %v312 = vld [vmem:[%s3 + $0x68] sm:$0xff]
    %v313 = vld [vmem:[%s3 + $0x70] sm:$0xff]
    %v314 = vld [vmem:[%s3 + $0x78] sm:$0xff]
    %316 = vset.pattern.permute.xlu0 0
    %317 = vperm.xlu0 %316, %v299
    %v318 = vpop.permute.xlu0 %317
    %321 = vset.pattern.permute.xlu0 0
    %322 = vperm.xlu0 %321, %v300
    %v323 = vpop.permute.xlu0 %322
    %326 = vset.pattern.permute.xlu0 0
    %327 = vperm.xlu0 %326, %v301
    %v328 = vpop.permute.xlu0 %327
    %331 = vset.pattern.permute.xlu0 0
    %332 = vperm.xlu0 %331, %v302
    %v333 = vpop.permute.xlu0 %332
    %336 = vset.pattern.permute.xlu0 0
    %337 = vperm.xlu0 %336, %v303
    %v338 = vpop.permute.xlu0 %337
    %341 = vset.pattern.permute.xlu0 0
    %342 = vperm.xlu0 %341, %v304
    %v343 = vpop.permute.xlu0 %342
    %346 = vset.pattern.permute.xlu0 0
    %347 = vperm.xlu0 %346, %v305
    %v348 = vpop.permute.xlu0 %347
    %351 = vset.pattern.permute.xlu0 0
    %352 = vperm.xlu0 %351, %v306
    %v353 = vpop.permute.xlu0 %352
    %356 = vset.pattern.permute.xlu0 0
    %357 = vperm.xlu0 %356, %v307
    %v358 = vpop.permute.xlu0 %357
    %361 = vset.pattern.permute.xlu0 0
    %362 = vperm.xlu0 %361, %v308
    %v363 = vpop.permute.xlu0 %362
    %366 = vset.pattern.permute.xlu0 0
    %367 = vperm.xlu0 %366, %v309
    %v368 = vpop.permute.xlu0 %367
    %371 = vset.pattern.permute.xlu0 0
    %372 = vperm.xlu0 %371, %v310
    %v373 = vpop.permute.xlu0 %372
    %376 = vset.pattern.permute.xlu0 0
    %377 = vperm.xlu0 %376, %v311
    %v378 = vpop.permute.xlu0 %377
    %381 = vset.pattern.permute.xlu0 0
    %382 = vperm.xlu0 %381, %v312
    %v383 = vpop.permute.xlu0 %382
    %386 = vset.pattern.permute.xlu0 0
    %387 = vperm.xlu0 %386, %v313
    %v388 = vpop.permute.xlu0 %387
    %391 = vset.pattern.permute.xlu0 0
    %392 = vperm.xlu0 %391, %v314
    %v393 = vpop.permute.xlu0 %392
    %v395 = vmul.f32 %v283, %v318
    %v396 = vmul.f32 %v284, %v323
    %v397 = vmul.f32 %v285, %v328
    %v398 = vmul.f32 %v286, %v333
    %v399 = vmul.f32 %v287, %v338
    %v400 = vmul.f32 %v288, %v343
    %v401 = vmul.f32 %v289, %v348
    %v402 = vmul.f32 %v290, %v353
    %v403 = vmul.f32 %v291, %v358
    %v404 = vmul.f32 %v292, %v363
    %v405 = vmul.f32 %v293, %v368
    %v406 = vmul.f32 %v294, %v373
    %v407 = vmul.f32 %v295, %v378
    %v408 = vmul.f32 %v296, %v383
    %v409 = vmul.f32 %v297, %v388
    %v410 = vmul.f32 %v298, %v393
    %v411 = vld [vmem:[#allocation2] sm:$0xff]
    %v412 = vld [vmem:[#allocation2 + $0x8] sm:$0xff]
    %v413 = vld [vmem:[#allocation8] sm:$0xf]
    %v414 = vld [vmem:[#allocation8 + $0x4] sm:$0xf]
    %v415 = vpack.c.bf16 %v396, %v395
    %v416 = vpack.c.bf16 %v398, %v397
    %v417 = vpack.c.bf16 %v400, %v399
    %v418 = vpack.c.bf16 %v402, %v401
    %v419 = vpack.c.bf16 %v404, %v403
    %v420 = vpack.c.bf16 %v406, %v405
    %v421 = vpack.c.bf16 %v408, %v407
    %v422 = vpack.c.bf16 %v410, %v409
    %v425 = vunpack.c.l.b16 %v413
    %v426 = vunpack.c.l.b16 %v414
    %v427 = vpack.c.b16 %v426, %v425
    %429 = vmatpush.bf16.msra.mxu0 %v422
    %430 = vmatpush.bf16.msra.mxu0 %v421
    %431 = vmatpush.bf16.msra.mxu0 %v420
    %432 = vmatpush.bf16.msra.mxu0 %v419
    %433 = vmatpush.bf16.msra.mxu0 %v418
    %434 = vmatpush.bf16.msra.mxu0 %v417
    %435 = vmatpush.bf16.msra.mxu0 %v416
    %436 = vmatpush.bf16.msra.mxu0 %v415
    %437 = vmatmul.bf16.gmra.mxu0 %v427
    %v438 = vpop.f32.mrf.mxu0
    %v439 = vadd.f32 0.0, %v438
    %v440 = vpop.f32.mrf.mxu0
    %v441 = vadd.f32 0.0, %v440
    %442 = vdwg.mxu0
    %v443 = vadd.f32 %v411, %v439
    %v444 = vadd.f32 %v412, %v441
    %445 = vst [vmem:[#allocation2] sm:$0xff] %v443
    %446 = vst [vmem:[#allocation2 + $0x8] sm:$0xff] %v444
    // Predicated region
    $region38: #{tpu_custom_call.1} parent=1 // pred_check
      %p447 = pneg %p68
    $region39: #{tpu_custom_call.1} parent=1 // pred_check_branch
      %449 = sbr.rel (%p447) target = $region41
    $region40: #{tpu_custom_call.1} parent=1 // pred_region
      %v450 = vld [vmem:[#allocation2] sm:$0xff]
      %v451 = vld [vmem:[#allocation2 + $0x8] sm:$0xff]
      %452 = vst [vmem:[#allocation9] sm:$0xff] %v450
      %453 = vst [vmem:[#allocation9 + $0x8] sm:$0xff] %v451
    $region41: #{tpu_custom_call.1} parent=1 // pred_fallthru
      _
    // Predicated region
    $region42: #{tpu_custom_call.1} parent=1 // pred_check
      _
    $region43: #{tpu_custom_call.1} parent=1 // pred_check_branch
      %455 = sbr.rel (0) target = $region45
    $region44: #{tpu_custom_call.1} parent=1 // pred_region
      %457 = vsyncadd [#allocation5], 0
      %s458 = sshll.u32 [#allocation9], 4
      %s459 = int_to_ptr.vmem [resolvable:$true] %s458
      %s460 = sshll.u32 %s5, 4
      %s461 = int_to_ptr.hbm [resolvable:$true] %s460
      %466 = dma.vmem_to_hbm [thread:$0]  %s459, 256, %s461, [#allocation5], 128, 128, 8
    $region45: #{tpu_custom_call.1} parent=1 // pred_fallthru
      _
    // Predicated region
    $region46: #{tpu_custom_call.1} parent=1 // pred_check
      _
    $region47: #{tpu_custom_call.1} parent=1 // pred_check_branch
      %468 = sbr.rel (0) target = $region49
    $region48: #{tpu_custom_call.1} parent=1 // pred_region
      %470 = dma.done [#allocation5], 256
    $region49: #{tpu_custom_call.1} parent=1 // pred_fallthru
      _
    %471 = vsyncpa [#allocation4], 1
    %472 = vsyncpa [#allocation7], 1
    %473 = vsyncpa [#allocation5], 1

</llo_original>
